<compile_context>
chip_gen: v6e
topology: v6e:2x2x1
jax: 0.10.0
libtpu: 0.0.40
codegen_flags: <defaults>
</compile_context>

<pallas_src>
import jax
import jax.numpy as jnp
from jax.experimental import pallas as pl
from jax.experimental.pallas import tpu as pltpu


LANES = 1024        # lane-dense last dim (multiple of 128)
TILE_ROWS = 512     # 512 * 1024 * 4 B = 2 MiB per f32 tile


def _add_one_kernel(x_ref, o_ref):
    # Pure VPU elementwise op on the whole VMEM tile.
    o_ref[...] = x_ref[...] + 1


def _add_one_pallas_2d(x2d: jax.Array, tile_rows: int) -> jax.Array:
    rows, lanes = x2d.shape
    grid = (rows // tile_rows,)
    return pl.pallas_call(
        _add_one_kernel,
        out_shape=jax.ShapeDtypeStruct((rows, lanes), x2d.dtype),
        grid_spec=pltpu.PrefetchScalarGridSpec(
            num_scalar_prefetch=0,
            grid=grid,
            in_specs=[pl.BlockSpec((tile_rows, lanes), lambda i: (i, 0))],
            out_specs=pl.BlockSpec((tile_rows, lanes), lambda i: (i, 0)),
        ),
        compiler_params=pltpu.CompilerParams(
            # Independent tiles -> shard grid steps across TCs (v7x megacore);
            # harmless no-op on single-TC v5e / v6e.
            dimension_semantics=("parallel",),
            vmem_limit_bytes=32 << 20,
        ),
    )(x2d)


def model1_forward(x: jax.Array, *, force_pallas: bool = False) -> jax.Array:
    """Equivalent of Model1.forward(input) = input + 1 (shape/dtype preserved)."""
    n = x.size
    nbytes = n * jnp.dtype(x.dtype).itemsize

    # Tiny inputs: the fused XLA add beats any custom-call launch overhead.
    if not force_pallas and nbytes < (1 << 20):
        return x + 1

    flat = x.reshape(-1)

    # Lane-dense layout: (rows, LANES) with LANES a multiple of 128.
    rows = pl.cdiv(n, LANES)
    if rows <= TILE_ROWS:
        # Single block covering the full row extent (full-dim exception to the
        # (8,128) rule); last dim is already a multiple of 128.
        tile_rows = rows
    else:
        # Multi-tile grid: pad rows up to a whole number of 2 MiB tiles so
        # every tile is a full, unmasked (512, 1024) block.
        tile_rows = TILE_ROWS
        rows = pl.cdiv(rows, tile_rows) * tile_rows

    padded = rows * LANES
    if padded != n:
        flat = jnp.pad(flat, (0, padded - n))
    x2d = flat.reshape(rows, LANES)

    out2d = _add_one_pallas_2d(x2d, tile_rows)

    return out2d.reshape(-1)[:n].reshape(x.shape)


if __name__ == "__main__":
    # Model1 has no parameters; only the input matters.
    key = jax.random.PRNGKey(0)
    k1, k2 = jax.random.split(key)

    # 1) Spec shape (NCHW, small) -- force the Pallas path to exercise the kernel.
    x_small = jax.random.normal(k1, (2, 4, 16, 16), dtype=jnp.float32)
    y_small = model1_forward(x_small, force_pallas=True)
    jax.block_until_ready(y_small)
    assert y_small.shape == x_small.shape and y_small.dtype == x_small.dtype
    assert jnp.allclose(y_small, x_small + 1), "small-input mismatch vs reference"

    # 2) Larger, non-divisible shape -- exercises the multi-tile grid and the
    #    remainder/padding path.
    x_big = jax.random.normal(k2, (4, 3, 500, 700), dtype=jnp.float32)
    y_big = model1_forward(x_big)
    jax.block_until_ready(y_big)
    assert y_big.shape == x_big.shape and y_big.dtype == x_big.dtype
    assert jnp.allclose(y_big, x_big + 1), "big-input mismatch vs reference"

    print("KERNEL_OK")
</pallas_src>

<mosaic_0001>
module attributes {stable_mosaic.version = 11 : i64} {
  func.func @_add_one_kernel(%arg0: i32, %arg1: memref<2x1024xf32, #tpu.memory_space<vmem>>, %arg2: memref<2x1024xf32, #tpu.memory_space<vmem>>) attributes {dimension_semantics = [#tpu.dimension_semantics<parallel>], iteration_bounds = array<i64: 1>, scalar_prefetch = 0 : i64, scratch_operands = 0 : i64, tpu.core_type = #tpu.core_type<tc>, window_params = [{transform_indices = @transform_0, window_bounds = array<i64: 2, 1024>}, {transform_indices = @transform_1, window_bounds = array<i64: 2, 1024>}]} {
    %c0 = arith.constant 0 : index
    %c0_0 = arith.constant 0 : index
    %0 = vector.load %arg1[%c0, %c0_0] : memref<2x1024xf32, #tpu.memory_space<vmem>>, vector<2x1024xf32>
    %cst = arith.constant 1.000000e+00 : f32
    %1 = vector.broadcast %cst : f32 to vector<2x1024xf32>
    %2 = arith.addf %0, %1 : vector<2x1024xf32>
    %c0_1 = arith.constant 0 : index
    %c0_2 = arith.constant 0 : index
    %3 = vector.load %arg2[%c0_1, %c0_2] : memref<2x1024xf32, #tpu.memory_space<vmem>>, vector<2x1024xf32>
    tpu.vector_store %arg2[%c0_1, %c0_2], %2 {strides = array<i32>} : memref<2x1024xf32, #tpu.memory_space<vmem>>, vector<2x1024xf32>,
    return
  }
  func.func @transform_0(%arg0: i32) -> (i32, i32) {
    %c0_i32 = arith.constant 0 : i32
    %c0_i32_0 = arith.constant 0 : i32
    return %arg0, %c0_i32 : i32, i32
  }
  func.func @transform_1(%arg0: i32) -> (i32, i32) {
    %c0_i32 = arith.constant 0 : i32
    %c0_i32_0 = arith.constant 0 : i32
    return %arg0, %c0_i32 : i32, i32
  }
}

</mosaic_0001>

<llo_original>
// kernel: tpu_custom_call.1
$region0: #{tpu_custom_call.1}
  #allocation0 [shape = 'u32[]', space=smem, size = 0x4, offset = 0x4, fixed_abs, tag = 'smem constant byte address 0x4 - core index']
  #allocation1 [shape = 'u32[144,128]{1,0:T(1,128)}', space=vmem, size = 0x12000, scoped, tag = 'internal scratch']
  %s0 = inlined_call_operand.hbm [shape: f32[2,1024], index: 0, kind: input, shape index: {}]
  %s1 = inlined_call_operand.hbm [shape: f32[2,1024], index: 1, kind: output, shape index: {}]
  %s2 = sld [smem:[#allocation0]]
  $region18: #{tpu_custom_call.1} parent=0
    _
  %s4 = ssub.s32 1, %s2
  %s5 = scalar_select 0, %s4, %s2
  $region1: #{tpu_custom_call.1} parent=0
    #allocation2 [shape = 'u8[8192]{0}', space=vmem, size = 0x2000, scoped, tag = 'input window, operand 0, single buffered']
    #allocation3 [shape = 's32[1]{0}', space=sflag, size = 0x4, scoped, tag = 'scoped memory for tpu_custom_call.1']
    #allocation4 [shape = 's32[1]{0}', space=sflag, size = 0x4, scoped, tag = 'scoped memory for tpu_custom_call.1']
    #allocation5 [shape = 'u8[8192]{0}', space=vmem, size = 0x2000, scoped, tag = 'output window, operand 0, single buffered']
    %6 = vsyncpa [#allocation3], 0
    %7 = vsyncpa [#allocation4], 0
    // Predicated region
    $region2: #{tpu_custom_call.1} parent=1 // pred_check
      _
    $region3: #{tpu_custom_call.1} parent=1 // pred_check_branch
      %9 = sbr.rel (0) target = $region5
    $region4: #{tpu_custom_call.1} parent=1 // pred_region
      %s11 = ssub.s32 256, 256
      %12 = vsyncadd [#allocation3], %s11
      %s14 = sshll.u32 [#allocation2], 4
      %s15 = int_to_ptr.vmem [resolvable:$true] %s14
      %17 = dma.hbm_to_vmem [thread:$0]  %s0, 256, %s15, [#allocation3]
    $region5: #{tpu_custom_call.1} parent=1 // pred_fallthru
      _
    // Predicated region
    $region6: #{tpu_custom_call.1} parent=1 // pred_check
      _
    $region7: #{tpu_custom_call.1} parent=1 // pred_check_branch
      %19 = sbr.rel (0) target = $region9
    $region8: #{tpu_custom_call.1} parent=1 // pred_region
      %20 = dma.done [#allocation3], 256
    $region9: #{tpu_custom_call.1} parent=1 // pred_fallthru
      _
    %v21 = vld [vmem:[#allocation2] sm:$0xff]
    %v22 = vld [vmem:[#allocation2 + $0x8] sm:$0xff]
    %v23 = vadd.f32 %v21, 1.0
    %v24 = vadd.f32 %v22, 1.0
    %25 = vst [vmem:[#allocation5] sm:$0xff] %v23
    %26 = vst [vmem:[#allocation5 + $0x8] sm:$0xff] %v24
    // Predicated region
    $region10: #{tpu_custom_call.1} parent=1 // pred_check
      _
    $region11: #{tpu_custom_call.1} parent=1 // pred_check_branch
      %28 = sbr.rel (0) target = $region13
    $region12: #{tpu_custom_call.1} parent=1 // pred_region
      %s30 = ssub.s32 256, 256
      %31 = vsyncadd [#allocation4], %s30
      %s33 = sshll.u32 [#allocation5], 4
      %s34 = int_to_ptr.vmem [resolvable:$true] %s33
      %36 = dma.vmem_to_hbm [thread:$0]  %s34, 256, %s1, [#allocation4]
    $region13: #{tpu_custom_call.1} parent=1 // pred_fallthru
      _
    // Predicated region
    $region14: #{tpu_custom_call.1} parent=1 // pred_check
      _
    $region15: #{tpu_custom_call.1} parent=1 // pred_check_branch
      %38 = sbr.rel (0) target = $region17
    $region16: #{tpu_custom_call.1} parent=1 // pred_region
      %39 = dma.done [#allocation4], 256
    $region17: #{tpu_custom_call.1} parent=1 // pred_fallthru
      _
    %40 = vsyncpa [#allocation3], 1
    %41 = vsyncpa [#allocation4], 1

</llo_original>
